<compile_context>
chip_gen: v5e
topology: v5e:2x2
jax: 0.10.0
libtpu: 0.0.40
codegen_flags: <defaults>
</compile_context>

<pallas_src>
import jax
import jax.numpy as jnp
from jax import lax
from jax.experimental import pallas as pl
from jax.experimental.pallas import tpu as pltpu


# Max rows per grid step. Lane-padded x footprint is 128 * itemsize bytes/row,
# double-buffered, so these caps keep the x block <= 16 MiB on every gen
# (incl. v7x's 64 MiB VMEM) while amortizing the ~0.35 us per-step overhead.
_TILE_B_MAX_16BIT = 32768
_TILE_B_MAX_32BIT = 16384


def _round_up(n, m):
    return ((n + m - 1) // m) * m


def _choose_tile_b(batch, itemsize):
    """Multiple of 128; balanced across grid steps so tail waste is < 128 rows."""
    cap = _TILE_B_MAX_16BIT if itemsize <= 2 else _TILE_B_MAX_32BIT
    if batch <= cap:
        return _round_up(batch, 128)
    n_tiles = -(-batch // cap)                      # ceil
    return _round_up(-(-batch // n_tiles), 128)     # ceil(batch/n_tiles) -> x128


def _bpnet_kernel(x_ref, w1_ref, b1_ref, w2_ref, b2_ref, w3_ref, b3_ref,
                  o_ref):
    # x tile: (TILE_B, 17) in the caller's dtype -> bf16 for the MXU
    # (f32 accumulation via preferred_element_type keeps precision).
    x = x_ref[...]
    if x.dtype != jnp.bfloat16:
        x = x.astype(jnp.bfloat16)

    # fc1 + relu : contract feature axes -> (9, TILE_B)   (batch on lanes)
    h1 = lax.dot_general(w1_ref[...], x,
                         dimension_numbers=(((1,), (1,)), ((), ())),
                         preferred_element_type=jnp.float32)
    h1 = jnp.maximum(h1 + b1_ref[...], 0.0)

    # fc2 + relu : (4,9) @ (9,TILE_B) -> (4, TILE_B)
    h2 = lax.dot_general(w2_ref[...], h1.astype(jnp.bfloat16),
                         dimension_numbers=(((1,), (0,)), ((), ())),
                         preferred_element_type=jnp.float32)
    h2 = jnp.maximum(h2 + b2_ref[...], 0.0)

    # fc3        : (1,4) @ (4,TILE_B) -> (1, TILE_B), lane-dense store.
    out = lax.dot_general(w3_ref[...], h2.astype(jnp.bfloat16),
                          dimension_numbers=(((1,), (0,)), ((), ())),
                          preferred_element_type=jnp.float32)
    o_ref[...] = out + b3_ref[...]


@jax.jit
def bpnet_forward(x, params):
    """Forward pass of BPNet. x: (B, 17), any float dtype. Returns (B,) f32."""
    w1, b1, w2, b2, w3, b3 = params
    B, F = x.shape  # F == 17

    # Weights stay in PyTorch (out, in) layout (no transposes needed) and go
    # to bf16 for the MXU; biases stay f32 as (out, 1) columns so they
    # broadcast along the lane (batch) axis inside the kernel.
    w1 = w1.astype(jnp.bfloat16)                   # (9, 17)
    w2 = w2.astype(jnp.bfloat16)                   # (4, 9)
    w3 = w3.astype(jnp.bfloat16)                   # (1, 4)
    b1c = b1.reshape(-1, 1).astype(jnp.float32)    # (9, 1)
    b2c = b2.reshape(-1, 1).astype(jnp.float32)    # (4, 1)
    b3c = b3.reshape(-1, 1).astype(jnp.float32)    # (1, 1)

    # Batch tiling: no wrapper pad copy.  The last (ragged) block is padded by
    # Pallas; out-of-range output lanes are dropped by the masked store and
    # every batch element is an independent column, so tail garbage is inert.
    tile_b = _choose_tile_b(B, x.dtype.itemsize)
    grid = (pl.cdiv(B, tile_b),)

    in_specs = [
        pl.BlockSpec((tile_b, F), lambda i: (i, 0)),   # x: streamed per tile
        pl.BlockSpec((9, F), lambda i: (0, 0)),        # params: resident
        pl.BlockSpec((9, 1), lambda i: (0, 0)),
        pl.BlockSpec((4, 9), lambda i: (0, 0)),
        pl.BlockSpec((4, 1), lambda i: (0, 0)),
        pl.BlockSpec((1, 4), lambda i: (0, 0)),
        pl.BlockSpec((1, 1), lambda i: (0, 0)),
    ]
    out_specs = pl.BlockSpec((1, tile_b), lambda i: (0, i))  # lane-dense batch

    # Advisory cost hint: streaming-x, memory-bound custom call.
    flops = 2 * B * (17 * 9 + 9 * 4 + 4 * 1)
    param_bytes = (w1.size + w2.size + w3.size) * 2 + (b1c.size + b2c.size + b3c.size) * 4
    bytes_accessed = B * F * x.dtype.itemsize + B * 4 + int(param_bytes)
    cost = pl.CostEstimate(flops=flops, transcendentals=0,
                           bytes_accessed=bytes_accessed)

    out = pl.pallas_call(
        _bpnet_kernel,
        out_shape=jax.ShapeDtypeStruct((1, B), jnp.float32),
        grid_spec=pltpu.PrefetchScalarGridSpec(
            num_scalar_prefetch=0,
            grid=grid,
            in_specs=in_specs,
            out_specs=out_specs,
        ),
        compiler_params=pltpu.CompilerParams(
            dimension_semantics=("parallel",),          # megacore sharding
            vmem_limit_bytes=48 * 1024 * 1024,          # > v5e 16 MiB default,
        ),                                              # < v7x 64 MiB physical
        cost_estimate=cost,
    )(x, w1, b1c, w2, b2c, w3, b3c)

    # x.view(x.shape[0]) — return 1-D.
    return out[0, :]


def init_bpnet_params(key):
    """Deterministic init matching nn.Linear shapes: U(-1/sqrt(in), 1/sqrt(in))."""
    dims = [(17, 9), (9, 4), (4, 1)]
    params = []
    for fan_in, fan_out in dims:
        key, kw, kb = jax.random.split(key, 3)
        bound = 1.0 / jnp.sqrt(float(fan_in))
        w = jax.random.uniform(kw, (fan_out, fan_in), jnp.float32,
                               minval=-bound, maxval=bound)
        b = jax.random.uniform(kb, (fan_out,), jnp.float32,
                               minval=-bound, maxval=bound)
        params.extend([w, b])
    return tuple(params)


def _reference_forward(x, params):
    """Plain-JAX f32 reference matching the PyTorch module."""
    w1, b1, w2, b2, w3, b3 = params
    x = x.astype(jnp.float32)
    h = jnp.maximum(x @ w1.T + b1, 0.0)
    h = jnp.maximum(h @ w2.T + b2, 0.0)
    h = h @ w3.T + b3
    return h.reshape(x.shape[0])


if __name__ == "__main__":
    key = jax.random.PRNGKey(0)
    key, kx = jax.random.split(key)

    B = 8
    x = jax.random.normal(kx, (B, 17), dtype=jnp.float32)
    params = init_bpnet_params(key)

    y = bpnet_forward(x, params)
    jax.block_until_ready(y)

    y_ref = _reference_forward(x, params)
    assert y.shape == (B,)
    # bf16 MXU path with f32 accumulation vs f32 reference -> loosened tol.
    assert jnp.allclose(y, y_ref, atol=3e-2, rtol=3e-2)

    print("KERNEL_OK")
</pallas_src>

<mosaic_0001>
module attributes {stable_mosaic.version = 11 : i64} {
  func.func @_bpnet_kernel(%arg0: i32, %arg1: memref<128x17xf32, #tpu.memory_space<vmem>>, %arg2: memref<9x17xbf16, #tpu.memory_space<vmem>>, %arg3: memref<9x1xf32, #tpu.memory_space<vmem>>, %arg4: memref<4x9xbf16, #tpu.memory_space<vmem>>, %arg5: memref<4x1xf32, #tpu.memory_space<vmem>>, %arg6: memref<1x4xbf16, #tpu.memory_space<vmem>>, %arg7: memref<1x1xf32, #tpu.memory_space<vmem>>, %arg8: memref<1x128xf32, #tpu.memory_space<vmem>>) attributes {dimension_semantics = [#tpu.dimension_semantics<parallel>], iteration_bounds = array<i64: 1>, scalar_prefetch = 0 : i64, scratch_operands = 0 : i64, tpu.core_type = #tpu.core_type<tc>, window_params = [{transform_indices = @transform_0, window_bounds = array<i64: 128, 17>}, {pipeline_mode = #tpu.pipeline_mode<synchronous>, transform_indices = @transform_1, window_bounds = array<i64: 9, 17>}, {pipeline_mode = #tpu.pipeline_mode<synchronous>, transform_indices = @transform_2, window_bounds = array<i64: 9, 1>}, {pipeline_mode = #tpu.pipeline_mode<synchronous>, transform_indices = @transform_3, window_bounds = array<i64: 4, 9>}, {pipeline_mode = #tpu.pipeline_mode<synchronous>, transform_indices = @transform_4, window_bounds = array<i64: 4, 1>}, {pipeline_mode = #tpu.pipeline_mode<synchronous>, transform_indices = @transform_5, window_bounds = array<i64: 1, 4>}, {pipeline_mode = #tpu.pipeline_mode<synchronous>, transform_indices = @transform_6, window_bounds = array<i64: 1, 1>}, {transform_indices = @transform_7, window_bounds = array<i64: 1, 128>}]} {
    %c0 = arith.constant 0 : index
    %c0_0 = arith.constant 0 : index
    %0 = vector.load %arg1[%c0, %c0_0] : memref<128x17xf32, #tpu.memory_space<vmem>>, vector<128x17xf32>
    %1 = arith.truncf %0 : vector<128x17xf32> to vector<128x17xbf16>
    %c0_1 = arith.constant 0 : index
    %c0_2 = arith.constant 0 : index
    %2 = vector.load %arg2[%c0_1, %c0_2] : memref<9x17xbf16, #tpu.memory_space<vmem>>, vector<9x17xbf16>
    %cst = arith.constant dense<0.000000e+00> : vector<9x128xf32>
    %3 = tpu.matmul %2, %1, %cst {dimension_numbers = #tpu.dot_dimension_numbers<[1], [1], [0], [0], [0, 0, 1, 0], [], []>} : vector<9x17xbf16>, vector<128x17xbf16>, vector<9x128xf32> -> vector<9x128xf32>
    %c0_3 = arith.constant 0 : index
    %c0_4 = arith.constant 0 : index
    %4 = vector.load %arg3[%c0_3, %c0_4] : memref<9x1xf32, #tpu.memory_space<vmem>>, vector<9x1xf32>
    %5 = vector.broadcast %4 : vector<9x1xf32> to vector<9x128xf32>
    %6 = arith.addf %3, %5 : vector<9x128xf32>
    %cst_5 = arith.constant 0.000000e+00 : f32
    %7 = vector.broadcast %cst_5 : f32 to vector<9x128xf32>
    %8 = arith.maximumf %6, %7 : vector<9x128xf32>
    %c0_6 = arith.constant 0 : index
    %c0_7 = arith.constant 0 : index
    %9 = vector.load %arg4[%c0_6, %c0_7] : memref<4x9xbf16, #tpu.memory_space<vmem>>, vector<4x9xbf16>
    %10 = arith.truncf %8 : vector<9x128xf32> to vector<9x128xbf16>
    %cst_8 = arith.constant dense<0.000000e+00> : vector<4x128xf32>
    %11 = tpu.matmul %9, %10, %cst_8 {dimension_numbers = #tpu.dot_dimension_numbers<[1], [0], [0], [1], [0, 0, 1, 1], [], []>} : vector<4x9xbf16>, vector<9x128xbf16>, vector<4x128xf32> -> vector<4x128xf32>
    %c0_9 = arith.constant 0 : index
    %c0_10 = arith.constant 0 : index
    %12 = vector.load %arg5[%c0_9, %c0_10] : memref<4x1xf32, #tpu.memory_space<vmem>>, vector<4x1xf32>
    %13 = vector.broadcast %12 : vector<4x1xf32> to vector<4x128xf32>
    %14 = arith.addf %11, %13 : vector<4x128xf32>
    %cst_11 = arith.constant 0.000000e+00 : f32
    %15 = vector.broadcast %cst_11 : f32 to vector<4x128xf32>
    %16 = arith.maximumf %14, %15 : vector<4x128xf32>
    %c0_12 = arith.constant 0 : index
    %c0_13 = arith.constant 0 : index
    %17 = vector.load %arg6[%c0_12, %c0_13] : memref<1x4xbf16, #tpu.memory_space<vmem>>, vector<1x4xbf16>
    %18 = arith.truncf %16 : vector<4x128xf32> to vector<4x128xbf16>
    %cst_14 = arith.constant dense<0.000000e+00> : vector<1x128xf32>
    %19 = tpu.matmul %17, %18, %cst_14 {dimension_numbers = #tpu.dot_dimension_numbers<[1], [0], [0], [1], [0, 0, 1, 1], [], []>} : vector<1x4xbf16>, vector<4x128xbf16>, vector<1x128xf32> -> vector<1x128xf32>
    %c0_15 = arith.constant 0 : index
    %c0_16 = arith.constant 0 : index
    %20 = vector.load %arg7[%c0_15, %c0_16] : memref<1x1xf32, #tpu.memory_space<vmem>>, vector<1x1xf32>
    %21 = vector.broadcast %20 : vector<1x1xf32> to vector<1x128xf32>
    %22 = arith.addf %19, %21 : vector<1x128xf32>
    %c0_17 = arith.constant 0 : index
    %c0_18 = arith.constant 0 : index
    %23 = vector.load %arg8[%c0_17, %c0_18] : memref<1x128xf32, #tpu.memory_space<vmem>>, vector<1x128xf32>
    tpu.vector_store %arg8[%c0_17, %c0_18], %22 {strides = array<i32>} : memref<1x128xf32, #tpu.memory_space<vmem>>, vector<1x128xf32>,
    return
  }
  func.func @transform_0(%arg0: i32) -> (i32, i32) {
    %c0_i32 = arith.constant 0 : i32
    %c0_i32_0 = arith.constant 0 : i32
    return %arg0, %c0_i32 : i32, i32
  }
  func.func @transform_1(%arg0: i32) -> (i32, i32) {
    %c0_i32 = arith.constant 0 : i32
    %c0_i32_0 = arith.constant 0 : i32
    %c0_i32_1 = arith.constant 0 : i32
    return %c0_i32, %c0_i32_0 : i32, i32
  }
  func.func @transform_2(%arg0: i32) -> (i32, i32) {
    %c0_i32 = arith.constant 0 : i32
    %c0_i32_0 = arith.constant 0 : i32
    %c0_i32_1 = arith.constant 0 : i32
    return %c0_i32, %c0_i32_0 : i32, i32
  }
  func.func @transform_3(%arg0: i32) -> (i32, i32) {
    %c0_i32 = arith.constant 0 : i32
    %c0_i32_0 = arith.constant 0 : i32
    %c0_i32_1 = arith.constant 0 : i32
    return %c0_i32, %c0_i32_0 : i32, i32
  }
  func.func @transform_4(%arg0: i32) -> (i32, i32) {
    %c0_i32 = arith.constant 0 : i32
    %c0_i32_0 = arith.constant 0 : i32
    %c0_i32_1 = arith.constant 0 : i32
    return %c0_i32, %c0_i32_0 : i32, i32
  }
  func.func @transform_5(%arg0: i32) -> (i32, i32) {
    %c0_i32 = arith.constant 0 : i32
    %c0_i32_0 = arith.constant 0 : i32
    %c0_i32_1 = arith.constant 0 : i32
    return %c0_i32, %c0_i32_0 : i32, i32
  }
  func.func @transform_6(%arg0: i32) -> (i32, i32) {
    %c0_i32 = arith.constant 0 : i32
    %c0_i32_0 = arith.constant 0 : i32
    %c0_i32_1 = arith.constant 0 : i32
    return %c0_i32, %c0_i32_0 : i32, i32
  }
  func.func @transform_7(%arg0: i32) -> (i32, i32) {
    %c0_i32 = arith.constant 0 : i32
    %c0_i32_0 = arith.constant 0 : i32
    return %c0_i32, %arg0 : i32, i32
  }
}

</mosaic_0001>

<llo_original>
// kernel: bpnet_forward.1
$region0: #{bpnet_forward.1}
  #allocation0 [shape = 'u32[]', space=smem, size = 0x4, offset = 0x4, fixed_abs, tag = 'smem constant byte address 0x4 - core index']
  #allocation1 [shape = 'u32[72,128]{1,0:T(1,128)}', space=vmem, size = 0x9000, scoped, tag = 'internal scratch']
  #allocation2 [shape = 'f32[1,1]{1,0:T(1,128)S(1)}', space=vmem, size = 0x200, scoped, tag = 'scoped memory for bpnet_forward.1']
  %s0 = inlined_call_operand.vmem [shape: f32[8,17], index: 0, kind: input, shape index: {}]
  %s1 = inlined_call_operand.vmem [shape: bf16[9,17], index: 1, kind: input, shape index: {}]
  %s2 = inlined_call_operand.vmem [shape: f32[9,1], index: 2, kind: input, shape index: {}]
  %s3 = inlined_call_operand.vmem [shape: bf16[4,9], index: 3, kind: input, shape index: {}]
  %s4 = inlined_call_operand.vmem [shape: f32[4,1], index: 4, kind: input, shape index: {}]
  %s5 = inlined_call_operand.vmem [shape: bf16[1,4], index: 5, kind: input, shape index: {}]
  %s6 = inlined_call_operand.<no memory space> [shape: f32[1,1], index: 6, kind: input, shape index: {}]
  %s7 = inlined_call_operand.hbm [shape: f32[1,8], index: 7, kind: output, shape index: {}]
  %s8 = sld [smem:[#allocation0]]
  $region38: #{bpnet_forward.1} parent=0
    _
  %s10 = ssub.s32 1, %s8
  %s11 = scalar_select 0, %s10, %s8
  %v12 = vstv %s6
  %13 = vst [vmem:[#allocation2] sm:$0x1] %v12
  $region1: #{bpnet_forward.1} parent=0
    #allocation3 [shape = 'u8[512]{0}', space=vmem, size = 0x400, scoped, tag = 'output window, operand 0, single buffered']
    #allocation4 [shape = 's32[1]{0}', space=sflag, size = 0x4, scoped, tag = 'scoped memory for bpnet_forward.1']
    %14 = vsyncpa [#allocation4], 0
    // Predicated region
    $region2: #{bpnet_forward.1} parent=1 // pred_check
      _
    $region3: #{bpnet_forward.1} parent=1 // pred_check_branch
      %16 = sbr.rel (0) target = $region5
    $region4: #{bpnet_forward.1} parent=1 // pred_region
      _
    $region5: #{bpnet_forward.1} parent=1 // pred_fallthru
      _
    // Predicated region
    $region6: #{bpnet_forward.1} parent=1 // pred_check
      _
    $region7: #{bpnet_forward.1} parent=1 // pred_check_branch
      %18 = sbr.rel (0) target = $region9
    $region8: #{bpnet_forward.1} parent=1 // pred_region
      _
    $region9: #{bpnet_forward.1} parent=1 // pred_fallthru
      _
    // Predicated region
    $region10: #{bpnet_forward.1} parent=1 // pred_check
      _
    $region11: #{bpnet_forward.1} parent=1 // pred_check_branch
      %20 = sbr.rel (0) target = $region13
    $region12: #{bpnet_forward.1} parent=1 // pred_region
      _
    $region13: #{bpnet_forward.1} parent=1 // pred_fallthru
      _
    // Predicated region
    $region14: #{bpnet_forward.1} parent=1 // pred_check
      _
    $region15: #{bpnet_forward.1} parent=1 // pred_check_branch
      %22 = sbr.rel (0) target = $region17
    $region16: #{bpnet_forward.1} parent=1 // pred_region
      _
    $region17: #{bpnet_forward.1} parent=1 // pred_fallthru
      _
    // Predicated region
    $region18: #{bpnet_forward.1} parent=1 // pred_check
      _
    $region19: #{bpnet_forward.1} parent=1 // pred_check_branch
      %24 = sbr.rel (0) target = $region21
    $region20: #{bpnet_forward.1} parent=1 // pred_region
      _
    $region21: #{bpnet_forward.1} parent=1 // pred_fallthru
      _
    // Predicated region
    $region22: #{bpnet_forward.1} parent=1 // pred_check
      _
    $region23: #{bpnet_forward.1} parent=1 // pred_check_branch
      %26 = sbr.rel (0) target = $region25
    $region24: #{bpnet_forward.1} parent=1 // pred_region
      _
    $region25: #{bpnet_forward.1} parent=1 // pred_fallthru
      _
    // Predicated region
    $region26: #{bpnet_forward.1} parent=1 // pred_check
      _
    $region27: #{bpnet_forward.1} parent=1 // pred_check_branch
      %28 = sbr.rel (0) target = $region29
    $region28: #{bpnet_forward.1} parent=1 // pred_region
      _
    $region29: #{bpnet_forward.1} parent=1 // pred_fallthru
      _
    %v30 = vld [vmem:[%s0] sm:$0xff]
    %v31 = vld [vmem:[%s0 + $0x8] sm:$0xff]
    %v32 = vld [vmem:[%s0 + $0x10] sm:$0xff]
    %v33 = vld [vmem:[%s0 + $0x18] sm:$0xff]
    %v34 = vld [vmem:[%s0 + $0x20] sm:$0xff]
    %v35 = vld [vmem:[%s0 + $0x28] sm:$0xff]
    %v36 = vld [vmem:[%s0 + $0x30] sm:$0xff]
    %v37 = vld [vmem:[%s0 + $0x38] sm:$0xff]
    %v38 = vld [vmem:[%s0 + $0x40] sm:$0xff]
    %v39 = vld [vmem:[%s0 + $0x48] sm:$0xff]
    %v40 = vld [vmem:[%s0 + $0x50] sm:$0xff]
    %v41 = vld [vmem:[%s0 + $0x58] sm:$0xff]
    %v42 = vld [vmem:[%s0 + $0x60] sm:$0xff]
    %v43 = vld [vmem:[%s0 + $0x68] sm:$0xff]
    %v44 = vld [vmem:[%s0 + $0x70] sm:$0xff]
    %v45 = vld [vmem:[%s0 + $0x78] sm:$0xff]
    %v46 = vpack.c.bf16 %v31, %v30
    %v47 = vpack.c.bf16 %v33, %v32
    %v48 = vpack.c.bf16 %v35, %v34
    %v49 = vpack.c.bf16 %v37, %v36
    %v50 = vpack.c.bf16 %v39, %v38
    %v51 = vpack.c.bf16 %v41, %v40
    %v52 = vpack.c.bf16 %v43, %v42
    %v53 = vpack.c.bf16 %v45, %v44
    %v54 = vld [vmem:[%s1] sm:$0xf]
    %v55 = vld [vmem:[%s1 + $0x4] sm:$0x1]
    %v56 = vld [vmem:[%s2] sm:$0xff]
    %v57 = vld [vmem:[%s2 + $0x8] sm:$0x1]
    %59 = vset.pattern.permute.xlu0 0
    %60 = vperm.xlu0 %59, %v56
    %v61 = vpop.permute.xlu0 %60
    %64 = vset.pattern.permute.xlu0 0
    %65 = vperm.xlu0 %64, %v57
    %v66 = vpop.permute.xlu0 %65
    %v70 = vunpack.c.l.b16 %v54
    %v71 = vunpack.c.l.b16 %v55
    %v72 = vpack.c.b16 %v71, %v70
    %vm73 = vcmask 138240
    %v75 = vsel %vm73, %v72, 0
    %v78 = vsel %vm73, %v46, 0
    %v81 = vsel %vm73, %v47, 0
    %v84 = vsel %vm73, %v48, 0
    %v87 = vsel %vm73, %v49, 0
    %v90 = vsel %vm73, %v50, 0
    %v93 = vsel %vm73, %v51, 0
    %v96 = vsel %vm73, %v52, 0
    %v99 = vsel %vm73, %v53, 0
    %101 = vmatpush.bf16.xpose.msra.mxu0 %v99
    %102 = vmatpush.bf16.xpose.msra.mxu0 %v96
    %103 = vmatpush.bf16.xpose.msra.mxu0 %v93
    %104 = vmatpush.bf16.xpose.msra.mxu0 %v90
    %105 = vmatpush.bf16.xpose.msra.mxu0 %v87
    %106 = vmatpush.bf16.xpose.msra.mxu0 %v84
    %107 = vmatpush.bf16.xpose.msra.mxu0 %v81
    %108 = vmatpush.bf16.xpose.msra.mxu0 %v78
    %109 = vmatmul.bf16.gmra.mxu0 %v75
    %v110 = vpop.f32.mrf.mxu0
    %v111 = vadd.f32 %v61, %v110
    %v112 = vpop.f32.mrf.mxu0
    %v113 = vadd.f32 %v66, %v112
    %114 = vdwg.mxu0
    %v115 = vmax.f32 %v111, 0.0
    %v116 = vmax.f32 %v113, 0.0
    %v117 = vld [vmem:[%s3] sm:$0x3]
    %v118 = vpack.c.bf16 %v116, %v115
    %v119 = vld [vmem:[%s4] sm:$0xf]
    %121 = vset.pattern.permute.xlu0 0
    %122 = vperm.xlu0 %121, %v119
    %v123 = vpop.permute.xlu0 %122
    %vm125 = vcmask 72704
    %v127 = vsel %vm125, %v117, 0
    %vm129 = vcmask 1043456
    %vm130 = vcmask 1044480
    %v131 = vsel %vm129, 4294967295, 65535
    %v132 = vsel %vm130, %v131, 0
    %v134 = vand.u32 %v118, %v132
    %136 = vmatpush.bf16.msra.mxu0 0
    %137 = vmatpush.bf16.msra.mxu0 0
    %138 = vmatpush.bf16.msra.mxu0 0
    %139 = vmatpush.bf16.msra.mxu0 0
    %140 = vmatpush.bf16.msra.mxu0 0
    %141 = vmatpush.bf16.msra.mxu0 0
    %142 = vmatpush.bf16.msra.mxu0 0
    %143 = vmatpush.bf16.msra.mxu0 %v134
    %144 = vmatmul.bf16.gmra.mxu0 %v127
    %v145 = vpop.f32.mrf.mxu0
    %v146 = vadd.f32 %v123, %v145
    %v147 = vpop.f32.mrf.mxu0
    %148 = vdwg.mxu0
    %v149 = vmax.f32 %v146, 0.0
    %v150 = vld [vmem:[%s5] sm:$0x1]
    %v151 = vpack.c.bf16 %v149, %v149
    %v152 = vld [vmem:[#allocation2] sm:$0x1]
    %154 = vset.pattern.permute.xlu0 0
    %155 = vperm.xlu0 %154, %v152
    %v156 = vpop.permute.xlu0 %155
    %v158 = vperm.slane %v156, 0
    %vm159 = vcmask 31744
    %v161 = vsel %vm159, %v150, 0
    %vm163 = vcmask 1041408
    %v165 = vsel %vm163, %v151, 0
    %167 = vmatpush.bf16.msra.mxu0 0
    %168 = vmatpush.bf16.msra.mxu0 0
    %169 = vmatpush.bf16.msra.mxu0 0
    %170 = vmatpush.bf16.msra.mxu0 0
    %171 = vmatpush.bf16.msra.mxu0 0
    %172 = vmatpush.bf16.msra.mxu0 0
    %173 = vmatpush.bf16.msra.mxu0 0
    %174 = vmatpush.bf16.msra.mxu0 %v165
    %175 = vmatmul.bf16.gmra.mxu0 %v161
    %v176 = vpop.f32.mrf.mxu0
    %v177 = vadd.f32 %v158, %v176
    %v178 = vpop.f32.mrf.mxu0
    %179 = vdwg.mxu0
    %180 = vst [vmem:[#allocation3] sm:$0x1] %v177
    // Predicated region
    $region30: #{bpnet_forward.1} parent=1 // pred_check
      _
    $region31: #{bpnet_forward.1} parent=1 // pred_check_branch
      %182 = sbr.rel (0) target = $region33
    $region32: #{bpnet_forward.1} parent=1 // pred_region
      %184 = vsyncadd [#allocation4], 0
      %s186 = sshll.u32 [#allocation3], 4
      %s187 = int_to_ptr.vmem [resolvable:$true] %s186
      %s188 = sshll.u32 %s7, 4
      %s189 = int_to_ptr.hbm [resolvable:$true] %s188
      %191 = dma.vmem_to_hbm [thread:$0]  %s187, 16, %s189, [#allocation4]
    $region33: #{bpnet_forward.1} parent=1 // pred_fallthru
      _
    // Predicated region
    $region34: #{bpnet_forward.1} parent=1 // pred_check
      _
    $region35: #{bpnet_forward.1} parent=1 // pred_check_branch
      %193 = sbr.rel (0) target = $region37
    $region36: #{bpnet_forward.1} parent=1 // pred_region
      %195 = dma.done [#allocation4], 16
    $region37: #{bpnet_forward.1} parent=1 // pred_fallthru
      _
    %196 = vsyncpa [#allocation4], 1

</llo_original>
